<compile_context>
chip_gen: v7x
topology: tpu7x:2x2x1
jax: 0.10.0
libtpu: 0.0.40
codegen_flags: <defaults>
</compile_context>

<pallas_src>
import functools

import jax
import jax.numpy as jnp
from jax.experimental import pallas as pl
from jax.experimental.pallas import tpu as pltpu


# ---------------------------------------------------------------------------
# Kernel
# ---------------------------------------------------------------------------
def _image_mix_kernel(lam_ref, x_ref, o_ref):
    """One (B, TILE_D) tile: roll-by-1 along the (full) batch axis + convex mix.

    lam_ref : SMEM (1, 1) float32
    x_ref   : VMEM (B, TILE_D) native dtype
    o_ref   : VMEM (B, TILE_D) native dtype (aliased with the input in HBM)
    """
    lam = lam_ref[0, 0]
    # Mix in f32 for bit-closeness to the f32-accumulated reference / PyTorch path.
    # (A bf16-native path on v6e/v7x would shave VALU work but is not needed: the
    #  kernel is HBM-bandwidth bound and the roll sits in the free XLU slot.)
    x = x_ref[...].astype(jnp.float32)
    x_rolled = pltpu.roll(x, shift=1, axis=0)        # == torch.roll(batch, 1, 0)
    o_ref[...] = (lam * x + (1.0 - lam) * x_rolled).astype(o_ref.dtype)


# ---------------------------------------------------------------------------
# Tile sizing (generation-aware, sublane-padding-aware)
# ---------------------------------------------------------------------------
def _image_tile_cols(batch_size: int, d: int, itemsize: int):
    """Pick the D-tile width (lanes) and a matching vmem_limit_bytes."""
    # Generation-aware budgets: v5e/v6e have 128 MiB VMEM, v7x only 64 MiB / TC.
    try:
        vmem_cap = int(pltpu.get_tpu_info().vmem_capacity_bytes)
    except Exception:  # conservative fallback: size for the smallest (v7x) part
        vmem_cap = 64 * 1024 * 1024
    if vmem_cap >= 100 * 1024 * 1024:          # v5e / v6e (128 MiB parts)
        budget_bytes = 28 * 1024 * 1024        # double-buffered in+out pipeline bufs
        vmem_limit = 64 * 1024 * 1024
    else:                                      # v7x (64 MiB per TensorCore)
        budget_bytes = 20 * 1024 * 1024
        vmem_limit = 40 * 1024 * 1024

    # Real VMEM footprint of a (B, TILE_D) block includes sublane padding: rows
    # live in full (8,128) tiles, packed 8/16/32 deep for 4/2/1-byte dtypes.
    sublane_pack = max(1, 32 // max(itemsize, 1))
    b_padded = -(-batch_size // sublane_pack) * sublane_pack
    per_col_bytes = 4 * b_padded * itemsize            # (in + out) x 2 buffers
    max_cols = budget_bytes // max(per_col_bytes, 1)
    # Never collapse below 512 lanes: streaming BW drops to ~29% of roofline at
    # 128-wide tiles vs ~85% at 512-wide (worth slightly overshooting the budget).
    max_cols = max(512, max_cols)

    if max_cols >= d:
        tile = d
    else:
        tile = max(512, (max_cols // 128) * 128)        # lane-dense blocks

    # Give the ("parallel",) grid axis multiple steps so v7x's two TensorCores
    # both stream (harmless extra ~0.35us/step on single-TC v5e/v6e).
    if d // 8 >= 1024:
        tile = min(tile, (d // 8 // 128) * 128)
    elif d // 2 >= 512:
        tile = min(tile, (d // 2 // 128) * 128)

    if tile >= d:
        return d, vmem_limit                             # single full-width block

    # Prefer a tile that divides D exactly (unmasked vst on every step), but never
    # sacrifice more than ~25% of lane width to get it.
    if d % 128 == 0:
        floor = max(512, (tile * 3) // 4)
        t = tile
        while t >= floor:
            if d % t == 0:
                return t, vmem_limit
            t -= 128
    return tile, vmem_limit


# ---------------------------------------------------------------------------
# Wrapper
# ---------------------------------------------------------------------------
@functools.partial(jax.jit, static_argnames=("num_classes", "p", "alpha"))
def random_mixup(batch, target, key, *, num_classes, p=0.5, alpha=1.0):
    """batch: (B, C, H, W) float dtype, target: (B,) integer labels."""
    assert batch.ndim == 4, "Batch ndim should be 4."
    assert target.ndim == 1, "Target ndim should be 1."
    B, C, H, W = batch.shape
    D = C * H * W
    out_dtype = batch.dtype

    # Glue RNG (host-side torch.rand / torch._sample_dirichlet in the original):
    # Bernoulli(p) apply decision + Beta(alpha, alpha) lambda, done with jax.random.
    k_apply, k_beta = jax.random.split(key)
    apply = jax.random.uniform(k_apply) < p
    lam_beta = jax.random.beta(k_beta, alpha, alpha).astype(jnp.float32)
    lam_s = jnp.where(apply, lam_beta, jnp.float32(1.0))
    lam = lam_s.reshape(1, 1)

    # ---- target: tiny (B, num_classes) one-hot + mix, fused by XLA (no kernel) ---
    onehot = jax.nn.one_hot(target, num_classes, dtype=jnp.float32)
    tgt_out = (lam_s * onehot + (1.0 - lam_s) * jnp.roll(onehot, 1, axis=0)).astype(
        out_dtype
    )

    # ---- images: D-tiled, pipelined, parallel grid, output aliased over input ----
    x_flat = batch.reshape(B, D)                     # native dtype, no f32 copy
    tile_d, vmem_limit = _image_tile_cols(B, D, jnp.dtype(out_dtype).itemsize)
    grid = (pl.cdiv(D, tile_d),)

    def _mix_images(x):
        return pl.pallas_call(
            _image_mix_kernel,
            out_shape=jax.ShapeDtypeStruct((B, D), out_dtype),
            grid=grid,
            in_specs=[
                pl.BlockSpec(memory_space=pltpu.MemorySpace.SMEM),   # lam
                pl.BlockSpec((B, tile_d), lambda j: (0, j)),         # image tile
            ],
            out_specs=pl.BlockSpec((B, tile_d), lambda j: (0, j)),
            input_output_aliases={1: 0},   # write mixed images back over the input
            compiler_params=pltpu.CompilerParams(
                dimension_semantics=("parallel",),
                vmem_limit_bytes=vmem_limit,
            ),
        )(lam, x)

    # Skip the image kernel entirely when mixup is not applied (PyTorch early return).
    img_flat = jax.lax.cond(apply, _mix_images, lambda x: x, x_flat)
    return img_flat.reshape(B, C, H, W), tgt_out


# ---------------------------------------------------------------------------
# Pure-JAX reference (mirrors the PyTorch forward)
# ---------------------------------------------------------------------------
def _reference(batch, target, key, *, num_classes, p=0.5, alpha=1.0):
    k_apply, k_beta = jax.random.split(key)
    apply = jax.random.uniform(k_apply) < p
    lam_beta = jax.random.beta(k_beta, alpha, alpha)
    lam = jnp.where(apply, lam_beta, 1.0).astype(jnp.float32)
    onehot = jax.nn.one_hot(target, num_classes, dtype=batch.dtype)
    b_r = jnp.roll(batch, 1, axis=0)
    t_r = jnp.roll(onehot, 1, axis=0)
    img = lam * batch.astype(jnp.float32) + (1.0 - lam) * b_r.astype(jnp.float32)
    tgt = lam * onehot.astype(jnp.float32) + (1.0 - lam) * t_r.astype(jnp.float32)
    return img.astype(batch.dtype), tgt.astype(batch.dtype)


# ---------------------------------------------------------------------------
# Self-test
# ---------------------------------------------------------------------------
if __name__ == "__main__":
    def _check(B, C, H, W, num_classes, p, alpha):
        root = jax.random.PRNGKey(0)
        k_img, k_tgt, k_mix = jax.random.split(root, 3)
        batch = jax.random.normal(k_img, (B, C, H, W), dtype=jnp.float32)
        target = jax.random.randint(k_tgt, (B,), 0, num_classes, dtype=jnp.int32)

        img_out, tgt_out = random_mixup(
            batch, target, k_mix, num_classes=num_classes, p=p, alpha=alpha
        )
        jax.block_until_ready((img_out, tgt_out))

        ref_img, ref_tgt = _reference(
            batch, target, k_mix, num_classes=num_classes, p=p, alpha=alpha
        )
        assert img_out.shape == (B, C, H, W) and tgt_out.shape == (B, num_classes)
        assert img_out.dtype == batch.dtype and tgt_out.dtype == batch.dtype
        assert jnp.allclose(img_out, ref_img, atol=1e-5, rtol=1e-5)
        assert jnp.allclose(tgt_out, ref_tgt, atol=1e-5, rtol=1e-5)

    # Small canonical shape: D=1024 -> two 512-lane grid steps (exercises tiling).
    _check(2, 4, 16, 16, 10, 0.5, 1.0)
    # p=1.0 forces the mixup branch; B=8 checks roll direction; D=585 is not a
    # multiple of 128 (full-width single block path).
    _check(8, 3, 15, 13, 7, 1.0, 0.2)

    print("KERNEL_OK")
</pallas_src>

<mosaic_0001>
module attributes {stable_mosaic.version = 11 : i64} {
  func.func @_image_mix_kernel(%arg0: i32, %arg1: memref<1x1xf32, #tpu.memory_space<smem>>, %arg2: memref<2x512xf32, #tpu.memory_space<vmem>>, %arg3: memref<2x512xf32, #tpu.memory_space<vmem>>) attributes {dimension_semantics = [#tpu.dimension_semantics<parallel>], iteration_bounds = array<i64: 2>, scalar_prefetch = 0 : i64, scratch_operands = 0 : i64, tpu.core_type = #tpu.core_type<tc>, window_params = [{transform_indices = @transform_0, window_bounds = array<i64: 1, 1>}, {transform_indices = @transform_1, window_bounds = array<i64: 2, 512>}, {transform_indices = @transform_2, window_bounds = array<i64: 2, 512>}]} {
    %c0 = arith.constant 0 : index
    %c0_0 = arith.constant 0 : index
    %0 = memref.load %arg1[%c0, %c0_0] : memref<1x1xf32, #tpu.memory_space<smem>>
    %c0_1 = arith.constant 0 : index
    %c0_2 = arith.constant 0 : index
    %1 = vector.load %arg2[%c0_1, %c0_2] : memref<2x512xf32, #tpu.memory_space<vmem>>, vector<2x512xf32>
    %c1_i32 = arith.constant 1 : i32
    %2 = tpu.dynamic_rotate %1 by %c1_i32 dim 0 : vector<2x512xf32>, i32 -> vector<2x512xf32>
    %3 = vector.broadcast %0 : f32 to vector<2x512xf32>
    %4 = arith.mulf %3, %1 : vector<2x512xf32>
    %cst = arith.constant 1.000000e+00 : f32
    %5 = arith.subf %cst, %0 : f32
    %6 = vector.broadcast %5 : f32 to vector<2x512xf32>
    %7 = arith.mulf %6, %2 : vector<2x512xf32>
    %8 = arith.addf %4, %7 : vector<2x512xf32>
    %c0_3 = arith.constant 0 : index
    %c0_4 = arith.constant 0 : index
    %9 = vector.load %arg3[%c0_3, %c0_4] : memref<2x512xf32, #tpu.memory_space<vmem>>, vector<2x512xf32>
    tpu.vector_store %arg3[%c0_3, %c0_4], %8 {strides = array<i32>} : memref<2x512xf32, #tpu.memory_space<vmem>>, vector<2x512xf32>,
    return
  }
  func.func @transform_0(%arg0: i32) -> (i32, i32) {
    %c0_i32 = arith.constant 0 : i32
    %c0_i32_0 = arith.constant 0 : i32
    %c0_i32_1 = arith.constant 0 : i32
    return %c0_i32, %c0_i32_0 : i32, i32
  }
  func.func @transform_1(%arg0: i32) -> (i32, i32) {
    %c0_i32 = arith.constant 0 : i32
    %c0_i32_0 = arith.constant 0 : i32
    return %c0_i32, %arg0 : i32, i32
  }
  func.func @transform_2(%arg0: i32) -> (i32, i32) {
    %c0_i32 = arith.constant 0 : i32
    %c0_i32_0 = arith.constant 0 : i32
    return %c0_i32, %arg0 : i32, i32
  }
}

</mosaic_0001>

<llo_original>
// kernel: branch_1_fun.1
$region0: #{branch_1_fun.1}
  #allocation0 [shape = 'u32[]', space=smem, size = 0x4, offset = 0x4, fixed_abs, tag = 'smem constant byte address 0x4 - core index']
  #allocation1 [shape = 'u32[144,128]{1,0:T(1,128)}', space=vmem, size = 0x12000, scoped, tag = 'internal scratch']
  #allocation2 [shape = 'f32[1,1]{1,0:T(1,128)S(6)}', space=smem, size = 0x200, scoped, tag = 'scoped memory for branch_1_fun.1']
  %s0 = inlined_call_operand.<no memory space> [shape: f32[1,1], index: 0, kind: input, shape index: {}]
  %s1 = inlined_call_operand.vmem [shape: f32[2,1024], index: 1, kind: input, shape index: {}, may-alias: {1,2}]
  %s2 = inlined_call_operand.vmem [shape: f32[2,1024], index: 2, kind: output, shape index: {}, may-alias: {1,2}]
  %s3 = sld [smem:[#allocation0]]
  $region41: #{branch_1_fun.1} parent=0
    _
  %s5 = ssub.s32 1, %s3
  %s6 = scalar_select 0, %s5, %s3
  %7 = sst [smem:[#allocation2]] %s0
  loop: start=0, step=1, limit=4
  $region2: #{branch_1_fun.1} parent=0 // loop_pre_header
    _
  $region3: #{branch_1_fun.1} parent=0 // loop_header
    %s9 = sphi 0, %s13
    %p10 = scmp.ge.s32.totalorder %s9, 4
    %s17 = sphi 0, %s17
    %s19 = sphi 0, %s17
    %s20 = sphi 0, %s19
    %s34 = sphi 0, %s20
    %s40 = sphi 0, %s42
    %s43 = sphi 0, %s40
    %s44 = sphi 0, %s43
    %s60 = sphi 0, %s44
    %s66 = sphi 0, %s68
    %s69 = sphi 0, %s66
    %s70 = sphi 0, %s69
    %s86 = sphi 0, %s70
  $region4: #{branch_1_fun.1} parent=0 // loop_header_branch
    %12 = sbr.rel (%p10) target = $region8
  $region5: #{branch_1_fun.1} parent=0 // loop_body
    %s14 = ssub.s32 %s9, 1
    %s15 = ssub.s32 %s9, 2
    %s16 = sadd.s32 %s9, 1
    %s18 = sadd.s32 %s17, 1
    %p21 = scmp.eq.s32.totalorder %s9, 1
    %p22 = scmp.ne.s32.totalorder %s17, %s19
    %p23 = scmp.eq.s32.totalorder %s9, 0
    %p24 = por %p22, %p23
    %p25 = scmp.ne.s32.totalorder %s17, %s19
    %p26 = scmp.eq.s32.totalorder %s14, 1
    %p27 = por %p25, %p26
    %p28 = scmp.ne.s32.totalorder %s19, %s20
    %p29 = scmp.eq.s32.totalorder %s14, 0
    %p30 = por %p28, %p29
    %p31 = scmp.ne.s32.totalorder %s19, %s20
    %p32 = scmp.eq.s32.totalorder %s15, 1
    %p33 = por %p31, %p32
    %p35 = scmp.ne.s32.totalorder %s20, %s34
    %p36 = scmp.eq.s32.totalorder %s15, 0
    %p37 = por %p35, %p36
    %s38 = ssub.s32 %s9, %s16
    %p39 = scmp.eq.s32.totalorder %s38, 0
    %s41 = sadd.s32 %s40, 1
    %s42 = scalar_select %p39, %s40, %s41
    %p45 = pneg %p39
    %p46 = scmp.eq.s32.totalorder %s9, 1
    %p47 = por %p45, %p46
    %p48 = scmp.ne.s32.totalorder %s40, %s43
    %p49 = scmp.eq.s32.totalorder %s9, 0
    %p50 = por %p48, %p49
    %p51 = scmp.ne.s32.totalorder %s40, %s43
    %p52 = scmp.eq.s32.totalorder %s14, 1
    %p53 = por %p51, %p52
    %p54 = scmp.ne.s32.totalorder %s43, %s44
    %p55 = scmp.eq.s32.totalorder %s14, 0
    %p56 = por %p54, %p55
    %p57 = scmp.ne.s32.totalorder %s43, %s44
    %p58 = scmp.eq.s32.totalorder %s15, 1
    %p59 = por %p57, %p58
    %p61 = scmp.ne.s32.totalorder %s44, %s60
    %p62 = scmp.eq.s32.totalorder %s15, 0
    %p63 = por %p61, %p62
    %s64 = ssub.s32 %s9, %s16
    %p65 = scmp.eq.s32.totalorder %s64, 0
    %s67 = sadd.s32 %s66, 1
    %s68 = scalar_select %p65, %s66, %s67
    %p71 = pneg %p65
    %p72 = scmp.eq.s32.totalorder %s9, 1
    %p73 = por %p71, %p72
    %p74 = scmp.ne.s32.totalorder %s66, %s69
    %p75 = scmp.eq.s32.totalorder %s9, 0
    %p76 = por %p74, %p75
    %p77 = scmp.ne.s32.totalorder %s66, %s69
    %p78 = scmp.eq.s32.totalorder %s14, 1
    %p79 = por %p77, %p78
    %p80 = scmp.ne.s32.totalorder %s69, %s70
    %p81 = scmp.eq.s32.totalorder %s14, 0
    %p82 = por %p80, %p81
    %p83 = scmp.ne.s32.totalorder %s69, %s70
    %p84 = scmp.eq.s32.totalorder %s15, 1
    %p85 = por %p83, %p84
    %p87 = scmp.ne.s32.totalorder %s70, %s86
    %p88 = scmp.eq.s32.totalorder %s15, 0
    %p89 = por %p87, %p88
    %p90 = scmp.le.s32.totalorder 1, %s9
    %p91 = scmp.lt.s32.totalorder %s9, 3
    %p92 = pnand %p90, %p91
    %p93 = pneg %p92
    // Predicated region
    $region9: #{branch_1_fun.1} parent=5 // pred_check
      _
    $region10: #{branch_1_fun.1} parent=5 // pred_check_branch
      %95 = sbr.rel (%p92) target = $region12
    $region11: #{branch_1_fun.1} parent=5 // pred_region
      %s96 = ssub.s32 %s9, 1
      // Predicated region
      $region13: #{branch_1_fun.1} parent=11 // pred_check
        %p97 = pneg %p30
      $region14: #{branch_1_fun.1} parent=11 // pred_check_branch
        %99 = sbr.rel (%p97) target = $region16
      $region15: #{branch_1_fun.1} parent=11 // pred_region
        _
      $region16: #{branch_1_fun.1} parent=11 // pred_fallthru
        _
    $region12: #{branch_1_fun.1} parent=5 // pred_fallthru
      _
    %p100 = scmp.lt.s32.totalorder %s9, 2
    // Predicated region
    $region17: #{branch_1_fun.1} parent=5 // pred_check
      %p101 = pneg %p100
    $region18: #{branch_1_fun.1} parent=5 // pred_check_branch
      %103 = sbr.rel (%p101) target = $region20
    $region19: #{branch_1_fun.1} parent=5 // pred_region
      // Predicated region
      $region21: #{branch_1_fun.1} parent=19 // pred_check
        %p104 = pneg %p50
      $region22: #{branch_1_fun.1} parent=19 // pred_check_branch
        %106 = sbr.rel (%p104) target = $region24
      $region23: #{branch_1_fun.1} parent=19 // pred_region
        %s107 = smul.u32 4, %s9
        %p108 = scmp.lt.s32.totalorder %s107, 7
        %s109 = scalar_select %p108, %s107, 7
        %s110 = smul.addr %s109, 2
        %s111 = scalar_lea.vmem %s1, %s110
        %s112 = smul.u32 4, %s9
      $region24: #{branch_1_fun.1} parent=19 // pred_fallthru
        _
    $region20: #{branch_1_fun.1} parent=5 // pred_fallthru
      _
    %p113 = scmp.le.s32.totalorder 1, %s9
    %p114 = scmp.lt.s32.totalorder %s9, 3
    %p115 = pnand %p113, %p114
    %p116 = pneg %p115
    // Predicated region
    $region25: #{branch_1_fun.1} parent=5 // pred_check
      _
    $region26: #{branch_1_fun.1} parent=5 // pred_check_branch
      %118 = sbr.rel (%p115) target = $region28
    $region27: #{branch_1_fun.1} parent=5 // pred_region
      %s119 = ssub.s32 %s9, 1
      %p120 = pneg %p30
      %p121 = pneg %p27
      %s122 = smul.u32 4, %s14
      %p123 = scmp.lt.s32.totalorder %s122, 7
      %s124 = scalar_select %p123, %s122, 7
      %s125 = smul.addr %s124, 2
      %s126 = scalar_lea.vmem %s1, %s125
      %p127 = pneg %p56
      %p128 = pneg %p53
      %p129 = pneg %p82
      %p130 = pneg %p79
      %s131 = smul.u32 4, %s14
      %p132 = scmp.lt.s32.totalorder %s131, 7
      %s133 = scalar_select %p132, %s131, 7
      %s134 = smul.addr %s133, 2
      %s135 = scalar_lea.vmem %s2, %s134
      %s136 = smul.u32 4, %s14
      %p137 = scmp.lt.s32.totalorder %s136, 7
      %s138 = scalar_select %p137, %s136, 7
      %s139 = smul.addr %s138, 2
      %s140 = scalar_lea.vmem %s1, %s139
      %s141 = smul.u32 4, %s14
      %s142 = smul.u32 4, %s14
      %p143 = scmp.lt.s32.totalorder %s142, 7
      %s144 = scalar_select %p143, %s142, 7
      %s145 = smul.addr %s144, 2
      %s146 = scalar_lea.vmem %s2, %s145
      %s147 = smul.u32 4, %s14
      %s148 = sld [smem:[#allocation2]]
      %v149 = vld [vmem:[%s140] sm:$0xff]
      %v151 = vcombine.high %v149, %v149
      %v153 = vunpack.c.l.s4 1983009808
      %v154 = vunpack.c.0.s8 %v153
      %v155 = vlaneseq
      %v156 = vshrl.u32 %v155, 7
      %v157 = vsub.s32 %v154, %v156
      %v158 = vrot.slane %v149, %v157
      %v160 = vunpack.c.l.s4 1983009808
      %v161 = vunpack.c.0.s8 %v160
      %v162 = vlaneseq
      %v163 = vshrl.u32 %v162, 7
      %v164 = vsub.s32 %v161, %v163
      %v165 = vrot.slane %v151, %v164
      %v166 = vcombine.high %v158, %v158
      %v167 = vcombine.high %v165, %v165
      %vm172 = vcmask 1047554
      %v173 = vrot.slane %v158, 6
      %v174 = vsel %vm172, %v173, %v158
      %v175 = vrot.slane %v166, 6
      %v176 = vsel %vm172, %v175, %v166
      %v177 = vrot.slane %v165, 6
      %v178 = vsel %vm172, %v177, %v165
      %v179 = vrot.slane %v167, 6
      %v180 = vsel %vm172, %v179, %v167
      %v181 = vrot.slane %v174, 6
      %v182 = vrot.slane %v176, 6
      %v183 = vrot.slane %v178, 6
      %v184 = vrot.slane %v180, 6
      %v185 = vsel %vm172, %v181, %v158
      %v186 = vsel %vm172, %v182, %v166
      %v187 = vsel %vm172, %v183, %v165
      %v188 = vsel %vm172, %v184, %v167
      %v189 = vstv %s148
      %v190 = vmul.f32 %v189, %v149
      %s191 = ssub.f32 1.0, %s148
      %v192 = vstv %s191
      %v193 = vmul.f32 %v192, %v185
      %v194 = vmul.f32 %v192, %v186
      %v195 = vmul.f32 %v192, %v187
      %v196 = vmul.f32 %v192, %v188
      %v201 = vcombine.low %v193, %v194
      %v202 = vcombine.low %v195, %v196
      %v204 = vunpack.c.l.s4 1983009808
      %v205 = vunpack.c.0.s8 %v204
      %v206 = vlaneseq
      %v207 = vshrl.u32 %v206, 7
      %v208 = vsub.s32 %v205, %v207
      %v209 = vrot.slane %v201, %v208
      %v211 = vunpack.c.l.s4 1983009808
      %v212 = vunpack.c.0.s8 %v211
      %v213 = vlaneseq
      %v214 = vshrl.u32 %v213, 7
      %v215 = vsub.s32 %v212, %v214
      %v216 = vrot.slane %v202, %v215
      %v217 = vcombine.low %v209, %v216
      %v218 = vcombine.high %v209, %v216
      %vm219 = vcmask 1040384
      %vm220 = vcmask 1042434
      %vm221 = vmor %vm219, %vm220
      %vm222 = vcmask 1044484
      %vm223 = vmor %vm221, %vm222
      %vm224 = vcmask 1046534
      %vm225 = vmor %vm223, %vm224
      %v226 = vrot.slane %v217, 7
      %v227 = vrot.slane %v226, 2
      %v228 = vrot.slane %v218, 7
      %v229 = vsel %vm225, %v227, %v228
      %v231 = vadd.f32 %v190, %v229
      %232 = vst [vmem:[%s146] sm:$0xff] %v231
      %s233 = smul.u32 4, %s14
      %p234 = scmp.lt.s32.totalorder %s233, 7
      %s235 = scalar_select %p234, %s233, 7
      %s236 = smul.addr %s235, 2
      %s237 = scalar_lea.vmem %s2, %s236
      // Predicated region
      $region29: #{branch_1_fun.1} parent=27 // pred_check
        %p238 = pneg %p79
      $region30: #{branch_1_fun.1} parent=27 // pred_check_branch
        %240 = sbr.rel (%p238) target = $region32
      $region31: #{branch_1_fun.1} parent=27 // pred_region
        %s241 = smul.u32 4, %s14
      $region32: #{branch_1_fun.1} parent=27 // pred_fallthru
        _
    $region28: #{branch_1_fun.1} parent=5 // pred_fallthru
      _
    %p242 = scmp.le.s32.totalorder 2, %s9
    // Predicated region
    $region33: #{branch_1_fun.1} parent=5 // pred_check
      %p243 = pneg %p242
    $region34: #{branch_1_fun.1} parent=5 // pred_check_branch
      %245 = sbr.rel (%p243) target = $region36
    $region35: #{branch_1_fun.1} parent=5 // pred_region
      %s246 = ssub.s32 %s9, 2
      // Predicated region
      $region37: #{branch_1_fun.1} parent=35 // pred_check
        %p247 = pneg %p85
      $region38: #{branch_1_fun.1} parent=35 // pred_check_branch
        %249 = sbr.rel (%p247) target = $region40
      $region39: #{branch_1_fun.1} parent=35 // pred_region
        %s250 = smul.u32 4, %s15
        %p251 = scmp.lt.s32.totalorder %s250, 7
        %s252 = scalar_select %p251, %s250, 7
        %s253 = smul.addr %s252, 2
        %s254 = scalar_lea.vmem %s2, %s253
      $region40: #{branch_1_fun.1} parent=35 // pred_fallthru
        _
    $region36: #{branch_1_fun.1} parent=5 // pred_fallthru
      _
  $region6: #{branch_1_fun.1} parent=0 // loop_footer
    %s13 = sadd.s32 1, %s9
  $region7: #{branch_1_fun.1} parent=0 // loop_footer_branch
    %8 = sbr.rel target = $region3
  $region8: #{branch_1_fun.1} parent=0 // loop_exit
    _

</llo_original>
